<compile_context>
chip_gen: v6e
topology: v6e:2x2x1
jax: 0.10.0
libtpu: 0.0.40
codegen_flags: <defaults>
</compile_context>

<pallas_src>
import functools

import jax
import jax.numpy as jnp
from jax import lax
from jax.experimental import pallas as pl
from jax.experimental.pallas import tpu as pltpu

_TARGET_BLOCK_BYTES = 2 * 1024 * 1024   # ~2 MiB per input block (double-buffered -> 4 MiB)


def _round_up(x, m):
    return ((x + m - 1) // m) * m


def _choose_fold(c, n):
    """Fold factor g: make W=g*c lane-dense (vs 128-lane vregs), W<=512, and
    keep N//g >= 8 so an 8-sublane block always fits the folded array."""
    gmax = max(1, min(n // 8, 512 // c))
    best_g, best_key = 1, (-1.0, -1)
    for g in range(1, gmax + 1):
        w = g * c
        key = (w / _round_up(w, 128), w)      # (lane density, prefer wider)
        if key > best_key:
            best_g, best_key = g, key
    return best_g


def _bce_sum_kernel(logs_ref, out_ref, acc_ref, *, nf, any_partial):
    """Accumulate sum of clamp(log1p(-exp(logs)), -100) over valid folded rows."""
    core = pl.program_id(0)
    step = pl.program_id(1)
    nsteps = pl.num_programs(1)
    blk = core * nsteps + step                 # global (unclamped) block index

    @pl.when(step == 0)
    def _init():
        acc_ref[...] = jnp.zeros_like(acc_ref)

    x = logs_ref[...].astype(jnp.float32)      # (TN, W); bf16 upcast in-kernel
    term = jnp.maximum(jnp.log1p(-jnp.exp(x)), -100.0)   # torch BCE clamps logs at -100
    tn, w = term.shape

    def _accum(vals):
        # (TN, W) -> (TN//8, 8, W) is a free major-dim split; the axis-0 sum is
        # plain elementwise vreg adds (VALU). Cross-lane/sublane reduce deferred.
        acc_ref[...] += vals.reshape(tn // 8, 8, w).sum(axis=0)

    if any_partial:
        is_partial = (blk + 1) * tn > nf       # only edge / duplicated blocks pay masking

        @pl.when(is_partial)
        def _masked():
            rows = blk * tn + lax.broadcasted_iota(jnp.int32, (tn, w), 0)
            _accum(jnp.where(rows < nf, term, 0.0))

        @pl.when(jnp.logical_not(is_partial))
        def _full():
            _accum(term)
    else:
        _accum(term)

    @pl.when(step == nsteps - 1)
    def _finalize():
        out_ref[...] = jnp.sum(acc_ref[...]).reshape(1, 1, 1)


def bce_duq_loss(logs, targets, *, tn_max=4096, num_cores=1):
    """Pallas implementation of BCE_DUQLoss.forward(logs, targets).

    num_cores: leading 'parallel' grid axis; set 2 on v7x (2 TensorCores/chip),
    leave 1 on v5e/v6e.
    """
    N, C = logs.shape
    targets = targets.astype(jnp.int32)

    # --- target-lane correction: tiny N-element gather, done in plain JAX ---
    lt = jnp.take_along_axis(logs, targets[:, None], axis=1)[:, 0].astype(jnp.float32)
    log_p_t = jnp.maximum(lt, -100.0)
    log_1mp_t = jnp.maximum(jnp.log1p(-jnp.exp(lt)), -100.0)
    corr = jnp.sum(log_p_t - log_1mp_t)

    # --- lane-dense fold geometry (all static Python ints) ---
    g = _choose_fold(C, N)
    W = g * C
    Nf = N // g

    s_main = jnp.float32(0.0)
    n_kernel_rows = 0
    if Nf >= 8:
        n_kernel_rows = Nf * g
        # Contiguous fold: no NEG_FILL padding, no extra HBM passes.
        folded = logs[:n_kernel_rows].reshape(Nf, W)

        itemsize = jnp.dtype(logs.dtype).itemsize
        tn_cap = max(8, ((_TARGET_BLOCK_BYTES // (W * itemsize)) // 8) * 8)
        TN = int(min(tn_cap, (Nf // 8) * 8, _round_up(tn_max, 8)))   # mult of 8, <= Nf
        tiles = -(-Nf // TN)
        steps_per_core = -(-tiles // num_cores)
        any_partial = (num_cores * steps_per_core * TN != Nf)
        last_tile = tiles - 1

        kernel = functools.partial(_bce_sum_kernel, nf=Nf, any_partial=any_partial)
        partials = pl.pallas_call(
            kernel,
            out_shape=jax.ShapeDtypeStruct((num_cores, 1, 1), jnp.float32),
            grid_spec=pltpu.PrefetchScalarGridSpec(
                num_scalar_prefetch=0,
                grid=(num_cores, steps_per_core),
                in_specs=[pl.BlockSpec(
                    (TN, W),
                    # Clamp so block starts never leave the array; duplicated
                    # blocks contribute 0 via the in-kernel row mask.
                    lambda i, j: (jnp.minimum(i * steps_per_core + j, last_tile), 0))],
                out_specs=pl.BlockSpec((1, 1, 1), lambda i, j: (i, 0, 0)),
                scratch_shapes=[pltpu.VMEM((8, W), jnp.float32)],
            ),
            compiler_params=pltpu.CompilerParams(
                dimension_semantics=("parallel", "arbitrary"),
                allow_input_fusion=[True],
            ),
        )(folded)
        s_main = jnp.sum(partials)

    # --- row tail (< g rows, or everything for tiny batches): plain JAX ---
    s_tail = jnp.float32(0.0)
    if n_kernel_rows < N:
        tail = logs[n_kernel_rows:].astype(jnp.float32)
        s_tail = jnp.sum(jnp.maximum(jnp.log1p(-jnp.exp(tail)), -100.0))

    total = s_main + s_tail + corr
    return -total / jnp.float32(N * C)


def bce_duq_loss_ref(logs, targets):
    """Pure-JAX reference for validation."""
    N, C = logs.shape
    logs = logs.astype(jnp.float32)
    Y = jax.nn.one_hot(targets, C, dtype=jnp.float32)
    log_p = jnp.maximum(logs, -100.0)
    log_1mp = jnp.maximum(jnp.log1p(-jnp.exp(logs)), -100.0)
    return jnp.mean(-(Y * log_p + (1.0 - Y) * log_1mp))


if __name__ == "__main__":
    key = jax.random.PRNGKey(0)

    def make_case(k, n, c, dtype=jnp.float32):
        k1, k2 = jax.random.split(k)
        probs = jax.random.uniform(k1, (n, c), minval=1e-3, maxval=1.0, dtype=jnp.float32)
        logs = jnp.log(probs).astype(dtype)   # DUQ "logs" are log RBF responses in (-inf, 0]
        tgt = jax.random.randint(k2, (n,), 0, c, dtype=jnp.int32)
        return logs, tgt

    # Case 1: module-sized demo (batch 8, classes 16), f32 logs.
    key, k = jax.random.split(key)
    logs1, tgt1 = make_case(k, 8, 16)
    loss1 = bce_duq_loss(logs1, tgt1)
    jax.block_until_ready(loss1)
    ref1 = bce_duq_loss_ref(logs1, tgt1)
    assert jnp.allclose(loss1, ref1, rtol=1e-5, atol=1e-5), (loss1, ref1)

    # Case 2: non-multiple batch, multi-step reduction, wrapper row tail.
    key, k = jax.random.split(key)
    logs2, tgt2 = make_case(k, 777, 16)
    loss2 = bce_duq_loss(logs2, tgt2, tn_max=16)
    ref2 = bce_duq_loss_ref(logs2, tgt2)
    assert jnp.allclose(loss2, ref2, rtol=1e-4, atol=1e-5), (loss2, ref2)

    # Case 3: bf16 ingest + class count not a multiple of 128 (C=100 -> W=400).
    key, k = jax.random.split(key)
    logs3, tgt3 = make_case(k, 37, 100, dtype=jnp.bfloat16)
    loss3 = bce_duq_loss(logs3, tgt3)
    ref3 = bce_duq_loss_ref(logs3, tgt3)
    assert jnp.allclose(loss3, ref3, rtol=1e-3, atol=1e-3), (loss3, ref3)

    # Case 4: explicit 2-core split (real 2x on v7x, harmless/serial elsewhere).
    key, k = jax.random.split(key)
    logs4, tgt4 = make_case(k, 1000, 16)
    loss4 = bce_duq_loss(logs4, tgt4, num_cores=2)
    ref4 = bce_duq_loss_ref(logs4, tgt4)
    assert jnp.allclose(loss4, ref4, rtol=1e-4, atol=1e-5), (loss4, ref4)

    jax.block_until_ready((loss1, loss2, loss3, loss4))
    print("KERNEL_OK")
</pallas_src>

<mosaic_0001>
module attributes {stable_mosaic.version = 11 : i64} {
  func.func @_bce_sum_kernel(%arg0: i32, %arg1: i32, %arg2: memref<8x16xf32, #tpu.memory_space<vmem>>, %arg3: memref<1x1x1xf32, #tpu.memory_space<vmem>>, %arg4: memref<8x16xf32, #tpu.memory_space<vmem>>) attributes {dimension_semantics = [#tpu.dimension_semantics<parallel>, #tpu.dimension_semantics<arbitrary>], iteration_bounds = array<i64: 1, 1>, scalar_prefetch = 0 : i64, scratch_operands = 1 : i64, tpu.core_type = #tpu.core_type<tc>, window_params = [{transform_indices = @transform_0, window_bounds = array<i64: 8, 16>}, {transform_indices = @transform_1, window_bounds = array<i64: 1, 1, 1>}]} {
    %c0_i32 = arith.constant 0 : i32
    %0 = arith.cmpi eq, %arg1, %c0_i32 : i32
    %1 = arith.extui %0 : i1 to i32
    %c0_i32_0 = arith.constant 0 : i32
    %2 = arith.cmpi ne, %1, %c0_i32_0 : i32
    scf.if %2 {
      %cst_10 = arith.constant 0.000000e+00 : f32
      %18 = vector.broadcast %cst_10 : f32 to vector<8x16xf32>
      %c0_11 = arith.constant 0 : index
      %c0_12 = arith.constant 0 : index
      %19 = vector.load %arg4[%c0_11, %c0_12] : memref<8x16xf32, #tpu.memory_space<vmem>>, vector<8x16xf32>
      tpu.vector_store %arg4[%c0_11, %c0_12], %18 {strides = array<i32>} : memref<8x16xf32, #tpu.memory_space<vmem>>, vector<8x16xf32>,
    } else {
    }
    %c0 = arith.constant 0 : index
    %c0_1 = arith.constant 0 : index
    %3 = vector.load %arg2[%c0, %c0_1] : memref<8x16xf32, #tpu.memory_space<vmem>>, vector<8x16xf32>
    %4 = math.exp %3 : vector<8x16xf32>
    %cst = arith.constant 0.000000e+00 : f32
    %5 = vector.broadcast %cst : f32 to vector<8x16xf32>
    %6 = arith.subf %5, %4 : vector<8x16xf32>
    %7 = math.log1p %6 : vector<8x16xf32>
    %cst_2 = arith.constant -1.000000e+02 : f32
    %8 = vector.broadcast %cst_2 : f32 to vector<8x16xf32>
    %9 = arith.maximumf %7, %8 : vector<8x16xf32>
    %c0_3 = arith.constant 0 : index
    %c0_4 = arith.constant 0 : index
    %10 = vector.load %arg4[%c0_3, %c0_4] : memref<8x16xf32, #tpu.memory_space<vmem>>, vector<8x16xf32>
    %11 = vector.shape_cast %9 : vector<8x16xf32> to vector<1x8x16xf32>
    %cst_5 = arith.constant dense<0.000000e+00> : vector<8x16xf32>
    %12 = vector.multi_reduction <add>, %11, %cst_5 [0] : vector<1x8x16xf32> to vector<8x16xf32>
    %13 = arith.addf %10, %12 : vector<8x16xf32>
    %c0_6 = arith.constant 0 : index
    %c0_7 = arith.constant 0 : index
    %14 = vector.load %arg4[%c0_6, %c0_7] : memref<8x16xf32, #tpu.memory_space<vmem>>, vector<8x16xf32>
    tpu.vector_store %arg4[%c0_6, %c0_7], %13 {strides = array<i32>} : memref<8x16xf32, #tpu.memory_space<vmem>>, vector<8x16xf32>,
    %c0_i32_8 = arith.constant 0 : i32
    %15 = arith.cmpi eq, %arg1, %c0_i32_8 : i32
    %16 = arith.extui %15 : i1 to i32
    %c0_i32_9 = arith.constant 0 : i32
    %17 = arith.cmpi ne, %16, %c0_i32_9 : i32
    scf.if %17 {
      %c0_10 = arith.constant 0 : index
      %c0_11 = arith.constant 0 : index
      %18 = vector.load %arg4[%c0_10, %c0_11] : memref<8x16xf32, #tpu.memory_space<vmem>>, vector<8x16xf32>
      %19 = vector.shape_cast %18 : vector<8x16xf32> to vector<1x8x16xf32>
      %cst_12 = arith.constant dense<0.000000e+00> : vector<1xf32>
      %20 = vector.multi_reduction <add>, %19, %cst_12 [1, 2] : vector<1x8x16xf32> to vector<1xf32>
      %21 = vector.shape_cast %20 : vector<1xf32> to vector<1x1x1xf32>
      %22 = vector.extract %21[0, 0, 0] : f32 from vector<1x1x1xf32>
      %23 = vector.broadcast %22 : f32 to vector<1x1x1xf32>
      %c0_13 = arith.constant 0 : index
      %c0_14 = arith.constant 0 : index
      %c0_15 = arith.constant 0 : index
      %24 = vector.load %arg3[%c0_13, %c0_14, %c0_15] : memref<1x1x1xf32, #tpu.memory_space<vmem>>, vector<1x1x1xf32>
      tpu.vector_store %arg3[%c0_13, %c0_14, %c0_15], %23 {strides = array<i32>} : memref<1x1x1xf32, #tpu.memory_space<vmem>>, vector<1x1x1xf32>,
    } else {
    }
    return
  }
  func.func @transform_0(%arg0: i32, %arg1: i32) -> (i32, i32) {
    %c1_i32 = arith.constant 1 : i32
    %0 = arith.muli %arg0, %c1_i32 : i32
    %1 = arith.addi %0, %arg1 : i32
    %c0_i32 = arith.constant 0 : i32
    %2 = arith.minsi %1, %c0_i32 : i32
    %c0_i32_0 = arith.constant 0 : i32
    %c0_i32_1 = arith.constant 0 : i32
    return %2, %c0_i32_0 : i32, i32
  }
  func.func @transform_1(%arg0: i32, %arg1: i32) -> (i32, i32, i32) {
    %c0_i32 = arith.constant 0 : i32
    %c0_i32_0 = arith.constant 0 : i32
    %c0_i32_1 = arith.constant 0 : i32
    return %arg0, %c0_i32, %c0_i32_0 : i32, i32, i32
  }
}

</mosaic_0001>

<llo_original>
// kernel: tpu_custom_call.1
$region0: #{tpu_custom_call.1}
  #allocation0 [shape = 'u32[]', space=smem, size = 0x4, offset = 0x4, fixed_abs, tag = 'smem constant byte address 0x4 - core index']
  #allocation1 [shape = 'u32[144,128]{1,0:T(1,128)}', space=vmem, size = 0x12000, scoped, tag = 'internal scratch']
  #allocation2 [shape = 'f32[8,16]{1,0:T(8,128)}', space=vmem, size = 0x1000, scoped, tag = 'scratch operand']
  %s0 = inlined_call_operand.hbm [shape: f32[8,16], index: 0, kind: input, shape index: {}]
  %s1 = inlined_call_operand.hbm [shape: f32[1,1,1], index: 1, kind: output, shape index: {}]
  %s2 = sld [smem:[#allocation0]]
  $region26: #{tpu_custom_call.1} parent=0
    _
  %s4 = ssub.s32 1, %s2
  %s5 = scalar_select 0, %s4, %s2
  $region1: #{tpu_custom_call.1} parent=0
    #allocation3 [shape = 'u8[4096]{0}', space=vmem, size = 0x1000, scoped, tag = 'input window, operand 0, single buffered']
    #allocation4 [shape = 's32[1]{0}', space=sflag, size = 0x4, scoped, tag = 'scoped memory for tpu_custom_call.1']
    #allocation5 [shape = 's32[1]{0}', space=sflag, size = 0x4, scoped, tag = 'scoped memory for tpu_custom_call.1']
    #allocation6 [shape = 'u8[512]{0}', space=vmem, size = 0x400, scoped, tag = 'output window, operand 0, single buffered']
    %6 = vsyncpa [#allocation4], 0
    %7 = vsyncpa [#allocation5], 0
    // Predicated region
    $region2: #{tpu_custom_call.1} parent=1 // pred_check
      _
    $region3: #{tpu_custom_call.1} parent=1 // pred_check_branch
      %9 = sbr.rel (0) target = $region5
    $region4: #{tpu_custom_call.1} parent=1 // pred_region
      %s10 = sadd.s32 0, 0
      %p11 = scmp.lt.s32.totalorder %s10, 0
      %s12 = scalar_select %p11, %s10, 0
      %s14 = ssub.s32 128, 128
      %15 = vsyncadd [#allocation4], %s14
      %s16 = smul.addr %s12, 128
      %s17 = scalar_lea.hbm %s0, %s16
      %s19 = sshll.u32 [#allocation3], 4
      %s20 = int_to_ptr.vmem [resolvable:$true] %s19
      %22 = dma.hbm_to_vmem [thread:$0]  %s17, 128, %s20, [#allocation4]
    $region5: #{tpu_custom_call.1} parent=1 // pred_fallthru
      _
    // Predicated region
    $region6: #{tpu_custom_call.1} parent=1 // pred_check
      _
    $region7: #{tpu_custom_call.1} parent=1 // pred_check_branch
      %24 = sbr.rel (0) target = $region9
    $region8: #{tpu_custom_call.1} parent=1 // pred_region
      %25 = dma.done [#allocation4], 128
    $region9: #{tpu_custom_call.1} parent=1 // pred_fallthru
      _
    %s26 = sadd.s32 0, 0
    %p27 = scmp.lt.s32.totalorder %s26, 0
    %s28 = scalar_select %p27, %s26, 0
    %p29 = scmp.eq.s32.totalorder 0, 0
    // Predicated region
    $region10: #{tpu_custom_call.1} parent=1 // pred_check
      %p30 = pneg %p29
    $region11: #{tpu_custom_call.1} parent=1 // pred_check_branch
      %32 = sbr.rel (%p30) target = $region13
    $region12: #{tpu_custom_call.1} parent=1 // pred_region
      %vm33 = vcmask 130048
      %34 = vst.msk [vmem:[#allocation2] sm:$0xff] %vm33, 0.0
    $region13: #{tpu_custom_call.1} parent=1 // pred_fallthru
      _
    %v35 = vld [vmem:[#allocation3] sm:$0xff]
    %v36 = vmul.f32 %v35, 1.442695
    %v37 = vpow.pop %v36
    %v38 = vsub.f32 0.0, %v37
    %v39 = vadd.f32 %v38, 1.0
    %v40 = vlog2.pop %v39
    %v41 = vmul.f32 %v40, 0.6931472
    %v42 = vmul.f32 -0.5, %v38
    %v43 = vadd.f32 %v42, 1.0
    %v44 = vmul.f32 %v43, %v38
    %v45 = vand.u32 2147483647, %v38
    %vm46 = vcmp.lt.f32.partialorder %v45, 0.0004427343
    %v47 = vsel %vm46, %v44, %v41
    %v48 = vmax.f32 %v47, -100.0
    %v49 = vld [vmem:[#allocation2] sm:$0xff]
    %v50 = vadd.f32 %v48, 0.0
    %v51 = vadd.f32 %v49, %v50
    %vm52 = vcmask 130048
    %53 = vst.msk [vmem:[#allocation2] sm:$0xff] %vm52, %v51
    // Predicated region
    $region14: #{tpu_custom_call.1} parent=1 // pred_check
      %p54 = pneg %p29
    $region15: #{tpu_custom_call.1} parent=1 // pred_check_branch
      %56 = sbr.rel (%p54) target = $region17
    $region16: #{tpu_custom_call.1} parent=1 // pred_region
      %v57 = vld [vmem:[#allocation2] sm:$0xff]
      %v58 = vsel %vm52, %v57, 0.0
      %59 = vadd.xlane.f32.xlu0 %v58
      %v60 = vpop.xlane.xlu0 %59
      %v61 = vrot.slane %v60, 4
      %v62 = vadd.f32 %v60, %v61
      %v63 = vrot.slane %v62, 2
      %v64 = vadd.f32 %v62, %v63
      %v65 = vrot.slane %v64, 1
      %v66 = vadd.f32 %v64, %v65
      %s67 = vtos %v66
      %v68 = vstv %s67
      %vm69 = vcmask 0
      %70 = vst.msk [vmem:[#allocation6] sm:$0x1] %vm69, %v68
    $region17: #{tpu_custom_call.1} parent=1 // pred_fallthru
      _
    // Predicated region
    $region18: #{tpu_custom_call.1} parent=1 // pred_check
      _
    $region19: #{tpu_custom_call.1} parent=1 // pred_check_branch
      %72 = sbr.rel (0) target = $region21
    $region20: #{tpu_custom_call.1} parent=1 // pred_region
      %s74 = ssub.s32 16, 16
      %75 = vsyncadd [#allocation5], %s74
      %s77 = sshll.u32 [#allocation6], 4
      %s78 = int_to_ptr.vmem [resolvable:$true] %s77
      %80 = dma.vmem_to_hbm [thread:$0]  %s78, 16, %s1, [#allocation5]
    $region21: #{tpu_custom_call.1} parent=1 // pred_fallthru
      _
    // Predicated region
    $region22: #{tpu_custom_call.1} parent=1 // pred_check
      _
    $region23: #{tpu_custom_call.1} parent=1 // pred_check_branch
      %82 = sbr.rel (0) target = $region25
    $region24: #{tpu_custom_call.1} parent=1 // pred_region
      %83 = dma.done [#allocation5], 16
    $region25: #{tpu_custom_call.1} parent=1 // pred_fallthru
      _
    %84 = vsyncpa [#allocation4], 1
    %85 = vsyncpa [#allocation5], 1

</llo_original>
